<compile_context>
chip_gen: v7x
topology: tpu7x:2x2x1
jax: 0.10.0
libtpu: 0.0.40
codegen_flags: <defaults>
</compile_context>

<pallas_src>
import jax
import jax.numpy as jnp
from jax.experimental import pallas as pl
from jax.experimental.pallas import tpu as pltpu


def _round_up(a, m):
    return -(-a // m) * m


def _choose_block_b(B, N, D_in, itemsize, target_bytes=1 << 19):
    # Aim for an x tile of ~512 KiB (guide: ~512-row tiles reach ~85% of HBM
    # roofline), sublane-aligned, but never bigger than the (8-padded) batch.
    rows = max(8, target_bytes // max(1, N * D_in * itemsize))
    rows = max(8, (rows // 8) * 8)
    return min(rows, _round_up(B, 8))


def han_attention_kernel(x_ref, wa_ref, ba_ref, wc_ref, bc_ref,
                         out_ref, score_ref):
    TB, N, D_in = x_ref.shape
    H = wa_ref.shape[1]

    x = x_ref[...]                                      # (TB, N, D_in)

    # ---- attention = tanh(Linear(D_in -> H)(x)) -------------------------
    # Fold batch into the MXU M dimension: (TB*N, D_in) @ (D_in, H).
    x2 = x.reshape(TB * N, D_in)
    h = jnp.tanh(
        jnp.dot(x2, wa_ref[...], preferred_element_type=jnp.float32)
        + ba_ref[...]                                   # (1, H) broadcast
    )                                                   # (TB*N, H) f32
    h3 = h.reshape(TB, N, H)                            # (TB, N, H)

    # ---- context = Linear(H -> 1), squeeze ------------------------------
    # 1-wide matmul replaced by VPU multiply + lane reduce over H.
    s = jnp.sum(h3 * wc_ref[...], axis=-1) + bc_ref[0]  # (TB, N) f32

    # ---- softmax over the sequence axis ---------------------------------
    # NOTE: assumes the full sequence (N) is resident in the block. If N*D_in
    # ever outgrows VMEM, tile the sequence axis and switch to an online
    # (running max / running sum) softmax with an "arbitrary" reduction axis.
    m = jnp.max(s, axis=-1, keepdims=True)
    e = jnp.exp(s - m)
    p = e * pl.reciprocal(jnp.sum(e, axis=-1, keepdims=True), approx=False)

    # ---- out = einsum('bnd,bn->bd', x, p) --------------------------------
    # M=1 matmul + transpose replaced by broadcast multiply + sublane reduce.
    out_ref[...] = jnp.sum(
        x.astype(jnp.float32) * p[:, :, None], axis=1
    ).astype(out_ref.dtype)                             # (TB, D_in)
    score_ref[...] = p.astype(score_ref.dtype)          # (TB, N)


def han_attention(x, wa, ba, wc, bc, *, block_b=None,
                  compute_dtype=jnp.float32):
    """x: (B, N, D_in); wa: (D_in, H); ba: (H,); wc: (H, 1); bc: scalar.

    Returns (out, attn_score) = ((B, D_in) f32, (B, N) f32).
    For v6e/v7x production runs pass compute_dtype=jnp.bfloat16 to feed the
    MXU bf16 (tanh / softmax / accumulation remain f32).
    """
    B, N, D_in = x.shape
    H = wa.shape[1]
    itemsize = jnp.dtype(compute_dtype).itemsize

    if block_b is None:
        block_b = _choose_block_b(B, N, D_in, itemsize)
    block_b = max(8, (block_b // 8) * 8)                # sublane-aligned

    Bp = _round_up(B, block_b)                          # pad tail block
    xp = x.astype(compute_dtype)
    if Bp != B:
        xp = jnp.pad(xp, ((0, Bp - B), (0, 0), (0, 0)))

    wa_c = wa.astype(compute_dtype)                     # MXU input dtype
    ba2 = ba.reshape(1, H).astype(jnp.float32)          # VPU math stays f32
    wc_row = wc.reshape(1, H).astype(jnp.float32)
    bc1 = jnp.asarray(bc, jnp.float32).reshape(1,)      # scalar -> SMEM

    grid = (Bp // block_b,)

    out, score = pl.pallas_call(
        han_attention_kernel,
        out_shape=(
            jax.ShapeDtypeStruct((Bp, D_in), jnp.float32),
            jax.ShapeDtypeStruct((Bp, N), jnp.float32),
        ),
        grid_spec=pltpu.PrefetchScalarGridSpec(
            num_scalar_prefetch=0,
            grid=grid,
            in_specs=[
                pl.BlockSpec((block_b, N, D_in), lambda b: (b, 0, 0)),  # x tile
                pl.BlockSpec((D_in, H), lambda b: (0, 0)),              # attention W
                pl.BlockSpec((1, H), lambda b: (0, 0)),                 # attention b
                pl.BlockSpec((1, H), lambda b: (0, 0)),                 # context W (row)
                pl.BlockSpec(memory_space=pltpu.MemorySpace.SMEM),      # context b (scalar)
            ],
            out_specs=[
                pl.BlockSpec((block_b, D_in), lambda b: (b, 0)),
                pl.BlockSpec((block_b, N), lambda b: (b, 0)),
            ],
        ),
        compiler_params=pltpu.CompilerParams(
            dimension_semantics=("parallel",)),
    )(xp, wa_c, ba2, wc_row, bc1)

    if Bp != B:
        out = out[:B]
        score = score[:B]
    return out, score


def _reference(x, wa, ba, wc, bc):
    h = jnp.tanh(jnp.einsum("bnd,dh->bnh", x, wa) + ba)
    s = (jnp.einsum("bnh,ho->bno", h, wc) + bc)[..., 0]
    p = jax.nn.softmax(s, axis=1)
    out = jnp.einsum("bnd,bn->bd", x, p)
    return out, p


if __name__ == "__main__":
    key = jax.random.PRNGKey(0)
    B, N, D_in, H = 2, 8, 32, 16   # in_dim=32, out_dim=16

    k1, k2, k3, k4, k5 = jax.random.split(key, 5)
    x = jax.random.normal(k1, (B, N, D_in), dtype=jnp.float32)
    # nn.Linear(in_dim, out_dim): weight (out_dim, in_dim) -> stored transposed
    wa = jax.random.normal(k2, (D_in, H), dtype=jnp.float32) * 0.1
    ba = jax.random.normal(k3, (H,), dtype=jnp.float32) * 0.1
    # nn.Linear(out_dim, 1): weight (1, out_dim) -> stored transposed (H, 1)
    wc = jax.random.normal(k4, (H, 1), dtype=jnp.float32) * 0.1
    bc = jax.random.normal(k5, (), dtype=jnp.float32) * 0.1

    out, score = jax.block_until_ready(han_attention(x, wa, ba, wc, bc))
    ref_out, ref_score = _reference(x, wa, ba, wc, bc)
    assert out.shape == (B, D_in) and score.shape == (B, N)
    assert jnp.allclose(out, ref_out, atol=1e-5, rtol=1e-5)
    assert jnp.allclose(score, ref_score, atol=1e-5, rtol=1e-5)

    # Second check: batch that needs tail padding and a multi-step grid.
    B2 = 20
    k6, _ = jax.random.split(k5)
    x2 = jax.random.normal(k6, (B2, N, D_in), dtype=jnp.float32)
    out2, score2 = jax.block_until_ready(
        han_attention(x2, wa, ba, wc, bc, block_b=8))
    ref_out2, ref_score2 = _reference(x2, wa, ba, wc, bc)
    assert out2.shape == (B2, D_in) and score2.shape == (B2, N)
    assert jnp.allclose(out2, ref_out2, atol=1e-5, rtol=1e-5)
    assert jnp.allclose(score2, ref_score2, atol=1e-5, rtol=1e-5)

    print("KERNEL_OK")
</pallas_src>

<mosaic_0001>
module attributes {stable_mosaic.version = 11 : i64} {
  func.func @han_attention_kernel(%arg0: i32, %arg1: memref<8x8x32xf32, #tpu.memory_space<vmem>>, %arg2: memref<32x16xf32, #tpu.memory_space<vmem>>, %arg3: memref<1x16xf32, #tpu.memory_space<vmem>>, %arg4: memref<1x16xf32, #tpu.memory_space<vmem>>, %arg5: memref<1xf32, #tpu.memory_space<smem>>, %arg6: memref<8x32xf32, #tpu.memory_space<vmem>>, %arg7: memref<8x8xf32, #tpu.memory_space<vmem>>) attributes {dimension_semantics = [#tpu.dimension_semantics<parallel>], iteration_bounds = array<i64: 1>, scalar_prefetch = 0 : i64, scratch_operands = 0 : i64, tpu.core_type = #tpu.core_type<tc>, window_params = [{transform_indices = @transform_0, window_bounds = array<i64: 8, 8, 32>}, {pipeline_mode = #tpu.pipeline_mode<synchronous>, transform_indices = @transform_1, window_bounds = array<i64: 32, 16>}, {pipeline_mode = #tpu.pipeline_mode<synchronous>, transform_indices = @transform_2, window_bounds = array<i64: 1, 16>}, {pipeline_mode = #tpu.pipeline_mode<synchronous>, transform_indices = @transform_3, window_bounds = array<i64: 1, 16>}, {transform_indices = @transform_4, window_bounds = array<i64: 1>}, {transform_indices = @transform_5, window_bounds = array<i64: 8, 32>}, {transform_indices = @transform_6, window_bounds = array<i64: 8, 8>}]} {
    %c0 = arith.constant 0 : index
    %c0_0 = arith.constant 0 : index
    %c0_1 = arith.constant 0 : index
    %0 = vector.load %arg1[%c0, %c0_0, %c0_1] : memref<8x8x32xf32, #tpu.memory_space<vmem>>, vector<8x8x32xf32>
    %1 = vector.shape_cast %0 : vector<8x8x32xf32> to vector<64x32xf32>
    %c0_2 = arith.constant 0 : index
    %c0_3 = arith.constant 0 : index
    %2 = vector.load %arg2[%c0_2, %c0_3] : memref<32x16xf32, #tpu.memory_space<vmem>>, vector<32x16xf32>
    %cst = arith.constant dense<0.000000e+00> : vector<64x16xf32>
    %3 = tpu.matmul %1, %2, %cst {dimension_numbers = #tpu.dot_dimension_numbers<[1], [0], [0], [1], [0, 0, 1, 1], [], []>} : vector<64x32xf32>, vector<32x16xf32>, vector<64x16xf32> -> vector<64x16xf32>
    %c0_4 = arith.constant 0 : index
    %c0_5 = arith.constant 0 : index
    %4 = vector.load %arg3[%c0_4, %c0_5] : memref<1x16xf32, #tpu.memory_space<vmem>>, vector<1x16xf32>
    %5 = vector.broadcast %4 : vector<1x16xf32> to vector<64x16xf32>
    %6 = arith.addf %3, %5 : vector<64x16xf32>
    %7 = math.tanh %6 : vector<64x16xf32>
    %8 = vector.shape_cast %7 : vector<64x16xf32> to vector<8x8x16xf32>
    %c0_6 = arith.constant 0 : index
    %c0_7 = arith.constant 0 : index
    %9 = vector.load %arg4[%c0_6, %c0_7] : memref<1x16xf32, #tpu.memory_space<vmem>>, vector<1x16xf32>
    %10 = vector.shape_cast %9 : vector<1x16xf32> to vector<1x1x16xf32>
    %11 = vector.broadcast %10 : vector<1x1x16xf32> to vector<8x8x16xf32>
    %12 = arith.mulf %8, %11 : vector<8x8x16xf32>
    %cst_8 = arith.constant dense<0.000000e+00> : vector<8x8xf32>
    %13 = vector.multi_reduction <add>, %12, %cst_8 [2] : vector<8x8x16xf32> to vector<8x8xf32>
    %c0_9 = arith.constant 0 : index
    %14 = memref.load %arg5[%c0_9] : memref<1xf32, #tpu.memory_space<smem>>
    %15 = vector.broadcast %14 : f32 to vector<8x8xf32>
    %16 = arith.addf %13, %15 : vector<8x8xf32>
    %cst_10 = arith.constant dense<0xFF800000> : vector<8xf32>
    %17 = vector.multi_reduction <maximumf>, %16, %cst_10 [1] : vector<8x8xf32> to vector<8xf32>
    %18 = vector.shape_cast %17 : vector<8xf32> to vector<8x1xf32>
    %19 = vector.broadcast %18 : vector<8x1xf32> to vector<8x8xf32>
    %20 = arith.subf %16, %19 : vector<8x8xf32>
    %21 = math.exp %20 : vector<8x8xf32>
    %cst_11 = arith.constant dense<0.000000e+00> : vector<8xf32>
    %22 = vector.multi_reduction <add>, %21, %cst_11 [1] : vector<8x8xf32> to vector<8xf32>
    %23 = vector.shape_cast %22 : vector<8xf32> to vector<8x1xf32>
    %24 = tpu.reciprocal %23 : vector<8x1xf32> -> vector<8x1xf32>
    %25 = vector.broadcast %24 : vector<8x1xf32> to vector<8x8xf32>
    %26 = arith.mulf %21, %25 : vector<8x8xf32>
    %27 = vector.shape_cast %26 : vector<8x8xf32> to vector<8x8x1xf32>
    %28 = vector.broadcast %27 : vector<8x8x1xf32> to vector<8x8x32xf32>
    %29 = arith.mulf %0, %28 : vector<8x8x32xf32>
    %cst_12 = arith.constant dense<0.000000e+00> : vector<8x32xf32>
    %30 = vector.multi_reduction <add>, %29, %cst_12 [1] : vector<8x8x32xf32> to vector<8x32xf32>
    %c0_13 = arith.constant 0 : index
    %c0_14 = arith.constant 0 : index
    %31 = vector.load %arg6[%c0_13, %c0_14] : memref<8x32xf32, #tpu.memory_space<vmem>>, vector<8x32xf32>
    tpu.vector_store %arg6[%c0_13, %c0_14], %30 {strides = array<i32>} : memref<8x32xf32, #tpu.memory_space<vmem>>, vector<8x32xf32>,
    %c0_15 = arith.constant 0 : index
    %c0_16 = arith.constant 0 : index
    %32 = vector.load %arg7[%c0_15, %c0_16] : memref<8x8xf32, #tpu.memory_space<vmem>>, vector<8x8xf32>
    tpu.vector_store %arg7[%c0_15, %c0_16], %26 {strides = array<i32>} : memref<8x8xf32, #tpu.memory_space<vmem>>, vector<8x8xf32>,
    return
  }
  func.func @transform_0(%arg0: i32) -> (i32, i32, i32) {
    %c0_i32 = arith.constant 0 : i32
    %c0_i32_0 = arith.constant 0 : i32
    %c0_i32_1 = arith.constant 0 : i32
    return %arg0, %c0_i32, %c0_i32_0 : i32, i32, i32
  }
  func.func @transform_1(%arg0: i32) -> (i32, i32) {
    %c0_i32 = arith.constant 0 : i32
    %c0_i32_0 = arith.constant 0 : i32
    %c0_i32_1 = arith.constant 0 : i32
    return %c0_i32, %c0_i32_0 : i32, i32
  }
  func.func @transform_2(%arg0: i32) -> (i32, i32) {
    %c0_i32 = arith.constant 0 : i32
    %c0_i32_0 = arith.constant 0 : i32
    %c0_i32_1 = arith.constant 0 : i32
    return %c0_i32, %c0_i32_0 : i32, i32
  }
  func.func @transform_3(%arg0: i32) -> (i32, i32) {
    %c0_i32 = arith.constant 0 : i32
    %c0_i32_0 = arith.constant 0 : i32
    %c0_i32_1 = arith.constant 0 : i32
    return %c0_i32, %c0_i32_0 : i32, i32
  }
  func.func @transform_4(%arg0: i32) -> i32 {
    %c0_i32 = arith.constant 0 : i32
    %c0_i32_0 = arith.constant 0 : i32
    return %c0_i32 : i32
  }
  func.func @transform_5(%arg0: i32) -> (i32, i32) {
    %c0_i32 = arith.constant 0 : i32
    %c0_i32_0 = arith.constant 0 : i32
    return %arg0, %c0_i32 : i32, i32
  }
  func.func @transform_6(%arg0: i32) -> (i32, i32) {
    %c0_i32 = arith.constant 0 : i32
    %c0_i32_0 = arith.constant 0 : i32
    return %arg0, %c0_i32 : i32, i32
  }
}

</mosaic_0001>

<llo_original>
// kernel: tpu_custom_call.1
$region0: #{tpu_custom_call.1}
  #allocation0 [shape = 'u32[]', space=smem, size = 0x4, offset = 0x4, fixed_abs, tag = 'smem constant byte address 0x4 - core index']
  #allocation1 [shape = 'u32[144,128]{1,0:T(1,128)}', space=vmem, size = 0x12000, scoped, tag = 'internal scratch']
  #allocation2 [shape = 'f32[1]{0:T(128)S(6)}', space=smem, size = 0x200, scoped, tag = 'scoped memory for tpu_custom_call.1']
  %s0 = inlined_call_operand.hbm [shape: f32[8,8,32], index: 0, kind: input, shape index: {}]
  %s1 = inlined_call_operand.vmem [shape: f32[32,16], index: 1, kind: input, shape index: {}]
  %s2 = inlined_call_operand.vmem [shape: f32[1,16], index: 2, kind: input, shape index: {}]
  %s3 = inlined_call_operand.vmem [shape: f32[1,16], index: 3, kind: input, shape index: {}]
  %s4 = inlined_call_operand.<no memory space> [shape: f32[1], index: 4, kind: input, shape index: {}]
  %s5 = inlined_call_operand.hbm [shape: f32[8,32], index: 5, kind: output, shape index: {0}]
  %s6 = inlined_call_operand.hbm [shape: f32[8,8], index: 6, kind: output, shape index: {1}]
  %7 = xla_tuple %s5, %s6
  %s8 = sld [smem:[#allocation0]]
  $region42: #{tpu_custom_call.1} parent=0
    _
  %s10 = ssub.s32 1, %s8
  %s11 = scalar_select 0, %s10, %s8
  %12 = sst [smem:[#allocation2]] %s4
  $region1: #{tpu_custom_call.1} parent=0
    #allocation3 [shape = 'u8[32768]{0}', space=vmem, size = 0x8000, scoped, tag = 'input window, operand 0, single buffered']
    #allocation4 [shape = 's32[1]{0}', space=sflag, size = 0x4, scoped, tag = 'scoped memory for tpu_custom_call.1']
    #allocation5 [shape = 's32[1]{0}', space=sflag, size = 0x4, scoped, tag = 'scoped memory for tpu_custom_call.1']
    #allocation6 [shape = 'u8[4096]{0}', space=vmem, size = 0x1000, scoped, tag = 'output window, operand 0, single buffered']
    #allocation7 [shape = 'u8[4096]{0}', space=vmem, size = 0x1000, scoped, tag = 'output window, operand 1, single buffered']
    #allocation8 [shape = 's32[1]{0}', space=sflag, size = 0x4, scoped, tag = 'scoped memory for tpu_custom_call.1']
    %13 = vsyncpa [#allocation4], 0
    %14 = vsyncpa [#allocation5], 0
    %15 = vsyncpa [#allocation8], 0
    // Predicated region
    $region2: #{tpu_custom_call.1} parent=1 // pred_check
      _
    $region3: #{tpu_custom_call.1} parent=1 // pred_check_branch
      %17 = sbr.rel (0) target = $region5
    $region4: #{tpu_custom_call.1} parent=1 // pred_region
      %s19 = ssub.s32 1024, 1024
      %20 = vsyncadd [#allocation4], %s19
      %s21 = sshll.u32 [#allocation3], 4
      %s22 = int_to_ptr.vmem [resolvable:$true] %s21
      %27 = dma.hbm_to_vmem [thread:$0]  %s0, 1024, %s22, [#allocation4], 128, 128, 8
    $region5: #{tpu_custom_call.1} parent=1 // pred_fallthru
      _
    // Predicated region
    $region6: #{tpu_custom_call.1} parent=1 // pred_check
      _
    $region7: #{tpu_custom_call.1} parent=1 // pred_check_branch
      %29 = sbr.rel (0) target = $region9
    $region8: #{tpu_custom_call.1} parent=1 // pred_region
      _
    $region9: #{tpu_custom_call.1} parent=1 // pred_fallthru
      _
    // Predicated region
    $region10: #{tpu_custom_call.1} parent=1 // pred_check
      _
    $region11: #{tpu_custom_call.1} parent=1 // pred_check_branch
      %31 = sbr.rel (0) target = $region13
    $region12: #{tpu_custom_call.1} parent=1 // pred_region
      _
    $region13: #{tpu_custom_call.1} parent=1 // pred_fallthru
      _
    // Predicated region
    $region14: #{tpu_custom_call.1} parent=1 // pred_check
      _
    $region15: #{tpu_custom_call.1} parent=1 // pred_check_branch
      %33 = sbr.rel (0) target = $region17
    $region16: #{tpu_custom_call.1} parent=1 // pred_region
      _
    $region17: #{tpu_custom_call.1} parent=1 // pred_fallthru
      _
    // Predicated region
    $region18: #{tpu_custom_call.1} parent=1 // pred_check
      _
    $region19: #{tpu_custom_call.1} parent=1 // pred_check_branch
      %35 = sbr.rel (0) target = $region21
    $region20: #{tpu_custom_call.1} parent=1 // pred_region
      _
    $region21: #{tpu_custom_call.1} parent=1 // pred_fallthru
      _
    // Predicated region
    $region22: #{tpu_custom_call.1} parent=1 // pred_check
      _
    $region23: #{tpu_custom_call.1} parent=1 // pred_check_branch
      %37 = sbr.rel (0) target = $region25
    $region24: #{tpu_custom_call.1} parent=1 // pred_region
      %38 = dma.done [#allocation4], 1024
    $region25: #{tpu_custom_call.1} parent=1 // pred_fallthru
      _
    %v39 = vld [vmem:[#allocation3] sm:$0xff]
    %v40 = vld [vmem:[#allocation3 + $0x8] sm:$0xff]
    %v41 = vld [vmem:[#allocation3 + $0x10] sm:$0xff]
    %v42 = vld [vmem:[#allocation3 + $0x18] sm:$0xff]
    %v43 = vld [vmem:[#allocation3 + $0x20] sm:$0xff]
    %v44 = vld [vmem:[#allocation3 + $0x28] sm:$0xff]
    %v45 = vld [vmem:[#allocation3 + $0x30] sm:$0xff]
    %v46 = vld [vmem:[#allocation3 + $0x38] sm:$0xff]
    %v47 = vld [vmem:[%s1] sm:$0xff]
    %v48 = vld [vmem:[%s1 + $0x8] sm:$0xff]
    %v49 = vld [vmem:[%s1 + $0x10] sm:$0xff]
    %v50 = vld [vmem:[%s1 + $0x18] sm:$0xff]
    %v51 = vld [vmem:[%s2] sm:$0x1]
    %v53 = vlaneseq
    %v54 = vshrl.u32 %v53, 7
    %v55 = vsub.s32 0, %v54
    %v56 = vrot.slane %v51, %v55
    %vm58 = vcmask 261120
    %v60 = vsel %vm58, %v39, 0
    %v63 = vsel %vm58, %v40, 0
    %v66 = vsel %vm58, %v41, 0
    %v69 = vsel %vm58, %v42, 0
    %v72 = vsel %vm58, %v43, 0
    %v75 = vsel %vm58, %v44, 0
    %v78 = vsel %vm58, %v45, 0
    %v81 = vsel %vm58, %v46, 0
    %83 = vmatprep.subr.mxu0 0.0
    %84 = vmatpush1.msra.mxu0 %v47
    %85 = vmatprep.subr.mxu0 0.0
    %86 = vmatpush1.msra.mxu0 %v48
    %87 = vmatprep.subr.mxu0 0.0
    %88 = vmatpush1.msra.mxu0 %v49
    %89 = vmatprep.subr.mxu0 0.0
    %90 = vmatpush1.msra.mxu0 %v50
    %91 = vmatprep.subr.mxu0 0.0
    %92 = vmatpush1.msra.mxu0 0.0
    %93 = vmatprep.subr.mxu0 0.0
    %94 = vmatpush1.msra.mxu0 0.0
    %95 = vmatprep.subr.mxu0 0.0
    %96 = vmatpush1.msra.mxu0 0.0
    %97 = vmatprep.subr.mxu0 0.0
    %98 = vmatpush1.msra.mxu0 0.0
    %99 = vmatprep.subr.mxu0 0.0
    %100 = vmatpush1.msra.mxu0 0.0
    %101 = vmatprep.subr.mxu0 0.0
    %102 = vmatpush1.msra.mxu0 0.0
    %103 = vmatprep.subr.mxu0 0.0
    %104 = vmatpush1.msra.mxu0 0.0
    %105 = vmatprep.subr.mxu0 0.0
    %106 = vmatpush1.msra.mxu0 0.0
    %107 = vmatprep.subr.mxu0 0.0
    %108 = vmatpush1.msra.mxu0 0.0
    %109 = vmatprep.subr.mxu0 0.0
    %110 = vmatpush1.msra.mxu0 0.0
    %111 = vmatprep.subr.mxu0 0.0
    %112 = vmatpush1.msra.mxu0 0.0
    %113 = vmatprep.subr.mxu0 0.0
    %114 = vmatpush1.msra.mxu0 0.0
    %115 = vmatprep.subr.mxu0 0.0
    %116 = vmatpush1.msra.mxu0 0.0
    %117 = vmatprep.subr.mxu0 0.0
    %118 = vmatpush1.msra.mxu0 0.0
    %119 = vmatprep.subr.mxu0 0.0
    %120 = vmatpush1.msra.mxu0 0.0
    %121 = vmatprep.subr.mxu0 0.0
    %122 = vmatpush1.msra.mxu0 0.0
    %123 = vmatprep.subr.mxu0 0.0
    %124 = vmatpush1.msra.mxu0 0.0
    %125 = vmatprep.subr.mxu0 0.0
    %126 = vmatpush1.msra.mxu0 0.0
    %127 = vmatprep.subr.mxu0 0.0
    %128 = vmatpush1.msra.mxu0 0.0
    %129 = vmatprep.subr.mxu0 0.0
    %130 = vmatpush1.msra.mxu0 0.0
    %131 = vmatprep.subr.mxu0 0.0
    %132 = vmatpush1.msra.mxu0 0.0
    %133 = vmatprep.subr.mxu0 0.0
    %134 = vmatpush1.msra.mxu0 0.0
    %135 = vmatprep.subr.mxu0 0.0
    %136 = vmatpush1.msra.mxu0 0.0
    %137 = vmatprep.subr.mxu0 0.0
    %138 = vmatpush1.msra.mxu0 0.0
    %139 = vmatprep.subr.mxu0 0.0
    %140 = vmatpush1.msra.mxu0 0.0
    %141 = vmatprep.subr.mxu0 0.0
    %142 = vmatpush1.msra.mxu0 0.0
    %143 = vmatprep.subr.mxu0 0.0
    %144 = vmatpush1.msra.mxu0 0.0
    %145 = vmatprep.subr.mxu0 0.0
    %146 = vmatpush1.msra.mxu0 0.0
    %147 = vmatprep.mubr.f32.mxu0 0.0
    %148 = vmatmul.mubr.f32.gmra.mrb[0].mxu0 %v60
    %v149 = vpop.f32.mrb[0].mxu0
    %v150 = vadd.f32 %v56, %v149
    %v151 = vpop.f32.mrb[0].mxu0
    %152 = vmatprep.mubr.f32.mxu0 0.0
    %153 = vmatmul.mubr.f32.gmra.mrb[0].mxu0 %v63
    %v154 = vpop.f32.mrb[0].mxu0
    %v155 = vadd.f32 %v56, %v154
    %v156 = vpop.f32.mrb[0].mxu0
    %157 = vmatprep.mubr.f32.mxu0 0.0
    %158 = vmatmul.mubr.f32.gmra.mrb[0].mxu0 %v66
    %v159 = vpop.f32.mrb[0].mxu0
    %v160 = vadd.f32 %v56, %v159
    %v161 = vpop.f32.mrb[0].mxu0
    %162 = vmatprep.mubr.f32.mxu0 0.0
    %163 = vmatmul.mubr.f32.gmra.mrb[0].mxu0 %v69
    %v164 = vpop.f32.mrb[0].mxu0
    %v165 = vadd.f32 %v56, %v164
    %v166 = vpop.f32.mrb[0].mxu0
    %167 = vmatprep.mubr.f32.mxu0 0.0
    %168 = vmatmul.mubr.f32.gmra.mrb[0].mxu0 %v72
    %v169 = vpop.f32.mrb[0].mxu0
    %v170 = vadd.f32 %v56, %v169
    %v171 = vpop.f32.mrb[0].mxu0
    %172 = vmatprep.mubr.f32.mxu0 0.0
    %173 = vmatmul.mubr.f32.gmra.mrb[0].mxu0 %v75
    %v174 = vpop.f32.mrb[0].mxu0
    %v175 = vadd.f32 %v56, %v174
    %v176 = vpop.f32.mrb[0].mxu0
    %177 = vmatprep.mubr.f32.mxu0 0.0
    %178 = vmatmul.mubr.f32.gmra.mrb[0].mxu0 %v78
    %v179 = vpop.f32.mrb[0].mxu0
    %v180 = vadd.f32 %v56, %v179
    %v181 = vpop.f32.mrb[0].mxu0
    %182 = vmatprep.mubr.f32.mxu0 0.0
    %183 = vmatmul.mubr.f32.gmra.mrb[0].mxu0 %v81
    %v184 = vpop.f32.mrb[0].mxu0
    %v185 = vadd.f32 %v56, %v184
    %v186 = vpop.f32.mrb[0].mxu0
    %187 = vdwg.mxu0
    %v188 = vtanh.pop %v150
    %v189 = vtanh.pop %v155
    %v190 = vtanh.pop %v160
    %v191 = vtanh.pop %v165
    %v192 = vtanh.pop %v170
    %v193 = vtanh.pop %v175
    %v194 = vtanh.pop %v180
    %v195 = vtanh.pop %v185
    %v196 = vld [vmem:[%s3] sm:$0x1]
    %v198 = vlaneseq
    %v199 = vshrl.u32 %v198, 7
    %v200 = vsub.s32 0, %v199
    %v201 = vrot.slane %v196, %v200
    %v203 = vmul.f32 %v188, %v201
    %v204 = vmul.f32 %v189, %v201
    %v205 = vmul.f32 %v190, %v201
    %v206 = vmul.f32 %v191, %v201
    %v207 = vmul.f32 %v192, %v201
    %v208 = vmul.f32 %v193, %v201
    %v209 = vmul.f32 %v194, %v201
    %v210 = vmul.f32 %v195, %v201
    %vm211 = vcmask 130048
    %v212 = vsel %vm211, %v203, 0.0
    %213 = vadd.xlane.f32.xlu0 %v212
    %v214 = vpop.xlane.xlu0 %213
    %v215 = vsel %vm211, %v204, 0.0
    %216 = vadd.xlane.f32.xlu0 %v215
    %v217 = vpop.xlane.xlu0 %216
    %v218 = vsel %vm211, %v205, 0.0
    %219 = vadd.xlane.f32.xlu0 %v218
    %v220 = vpop.xlane.xlu0 %219
    %v221 = vsel %vm211, %v206, 0.0
    %222 = vadd.xlane.f32.xlu0 %v221
    %v223 = vpop.xlane.xlu0 %222
    %v224 = vsel %vm211, %v207, 0.0
    %225 = vadd.xlane.f32.xlu0 %v224
    %v226 = vpop.xlane.xlu0 %225
    %v227 = vsel %vm211, %v208, 0.0
    %228 = vadd.xlane.f32.xlu0 %v227
    %v229 = vpop.xlane.xlu0 %228
    %v230 = vsel %vm211, %v209, 0.0
    %231 = vadd.xlane.f32.xlu0 %v230
    %v232 = vpop.xlane.xlu0 %231
    %v233 = vsel %vm211, %v210, 0.0
    %234 = vadd.xlane.f32.xlu0 %v233
    %v235 = vpop.xlane.xlu0 %234
    %s236 = sld [smem:[#allocation2]]
    %v237 = vstv %s236
    %v238 = vadd.f32 %v214, %v237
    %v239 = vadd.f32 %v217, %v237
    %v240 = vadd.f32 %v220, %v237
    %v241 = vadd.f32 %v223, %v237
    %v242 = vadd.f32 %v226, %v237
    %v243 = vadd.f32 %v229, %v237
    %v244 = vadd.f32 %v232, %v237
    %v245 = vadd.f32 %v235, %v237
    %v254 = vlaneseq
    %v255 = vand.u32 %v254, 127
    %v256 = vlaneseq
    %v257 = vshrl.u32 %v256, 7
    %v258 = vsub.s32 %v255, %v257
    %v259 = vrot.slane %v238, %v258
    %v260 = vlaneseq
    %v261 = vshrl.u32 %v260, 7
    %v262 = vsub.s32 %v255, %v261
    %v263 = vrot.slane %v239, %v262
    %v264 = vlaneseq
    %v265 = vshrl.u32 %v264, 7
    %v266 = vsub.s32 %v255, %v265
    %v267 = vrot.slane %v240, %v266
    %v268 = vlaneseq
    %v269 = vshrl.u32 %v268, 7
    %v270 = vsub.s32 %v255, %v269
    %v271 = vrot.slane %v241, %v270
    %v272 = vlaneseq
    %v273 = vshrl.u32 %v272, 7
    %v274 = vsub.s32 %v255, %v273
    %v275 = vrot.slane %v242, %v274
    %v276 = vlaneseq
    %v277 = vshrl.u32 %v276, 7
    %v278 = vsub.s32 %v255, %v277
    %v279 = vrot.slane %v243, %v278
    %v280 = vlaneseq
    %v281 = vshrl.u32 %v280, 7
    %v282 = vsub.s32 %v255, %v281
    %v283 = vrot.slane %v244, %v282
    %v284 = vlaneseq
    %v285 = vshrl.u32 %v284, 7
    %v286 = vsub.s32 %v255, %v285
    %v287 = vrot.slane %v245, %v286
    %vm288 = vcmask 1041409
    %v289 = vsel %vm288, %v263, %v259
    %vm290 = vcmask 1042434
    %v291 = vsel %vm290, %v267, %v289
    %vm292 = vcmask 1043459
    %v293 = vsel %vm292, %v271, %v291
    %vm294 = vcmask 1044484
    %v295 = vsel %vm294, %v275, %v293
    %vm296 = vcmask 1045509
    %v297 = vsel %vm296, %v279, %v295
    %vm298 = vcmask 1046534
    %v299 = vsel %vm298, %v283, %v297
    %vm300 = vcmask 1047559
    %v301 = vsel %vm300, %v287, %v299
    %vm303 = vcmask 64512
    %v304 = vsel %vm303, %v301, -inf
    %305 = vmax.xlane.f32.xlu0 %v304
    %v306 = vpop.xlane.xlu0 %305
    %v308 = vlaneseq
    %v309 = vshrl.u32 %v308, 7
    %v310 = vsub.s32 0, %v309
    %v311 = vrot.slane %v306, %v310
    %v312 = vlaneseq
    %v313 = vshrl.u32 %v312, 7
    %v314 = vsub.s32 1, %v313
    %v315 = vrot.slane %v306, %v314
    %v316 = vlaneseq
    %v317 = vshrl.u32 %v316, 7
    %v318 = vsub.s32 2, %v317
    %v319 = vrot.slane %v306, %v318
    %v320 = vlaneseq
    %v321 = vshrl.u32 %v320, 7
    %v322 = vsub.s32 3, %v321
    %v323 = vrot.slane %v306, %v322
    %v324 = vlaneseq
    %v325 = vshrl.u32 %v324, 7
    %v326 = vsub.s32 4, %v325
    %v327 = vrot.slane %v306, %v326
    %v328 = vlaneseq
    %v329 = vshrl.u32 %v328, 7
    %v330 = vsub.s32 5, %v329
    %v331 = vrot.slane %v306, %v330
    %v332 = vlaneseq
    %v333 = vshrl.u32 %v332, 7
    %v334 = vsub.s32 6, %v333
    %v335 = vrot.slane %v306, %v334
    %v336 = vlaneseq
    %v337 = vshrl.u32 %v336, 7
    %v338 = vsub.s32 7, %v337
    %v339 = vrot.slane %v306, %v338
    %v348 = vsub.f32 %v238, %v311
    %v349 = vsub.f32 %v239, %v315
    %v350 = vsub.f32 %v240, %v319
    %v351 = vsub.f32 %v241, %v323
    %v352 = vsub.f32 %v242, %v327
    %v353 = vsub.f32 %v243, %v331
    %v354 = vsub.f32 %v244, %v335
    %v355 = vsub.f32 %v245, %v339
    %v356 = vmul.f32 %v348, 1.442695
    %v357 = vpow.pop %v356
    %v358 = vmul.f32 %v349, 1.442695
    %v359 = vpow.pop %v358
    %v360 = vmul.f32 %v350, 1.442695
    %v361 = vpow.pop %v360
    %v362 = vmul.f32 %v351, 1.442695
    %v363 = vpow.pop %v362
    %v364 = vmul.f32 %v352, 1.442695
    %v365 = vpow.pop %v364
    %v366 = vmul.f32 %v353, 1.442695
    %v367 = vpow.pop %v366
    %v368 = vmul.f32 %v354, 1.442695
    %v369 = vpow.pop %v368
    %v370 = vmul.f32 %v355, 1.442695
    %v371 = vpow.pop %v370
    %380 = vset.pattern.permute.xlu0 0
    %381 = vperm.xlu0 %380, %v357
    %v382 = vpop.permute.xlu0 %381
    %383 = vset.pattern.permute.xlu0 0
    %384 = vperm.xlu0 %383, %v359
    %v385 = vpop.permute.xlu0 %384
    %386 = vset.pattern.permute.xlu0 0
    %387 = vperm.xlu0 %386, %v361
    %v388 = vpop.permute.xlu0 %387
    %389 = vset.pattern.permute.xlu0 0
    %390 = vperm.xlu0 %389, %v363
    %v391 = vpop.permute.xlu0 %390
    %392 = vset.pattern.permute.xlu0 0
    %393 = vperm.xlu0 %392, %v365
    %v394 = vpop.permute.xlu0 %393
    %395 = vset.pattern.permute.xlu0 0
    %396 = vperm.xlu0 %395, %v367
    %v397 = vpop.permute.xlu0 %396
    %398 = vset.pattern.permute.xlu0 0
    %399 = vperm.xlu0 %398, %v369
    %v400 = vpop.permute.xlu0 %399
    %401 = vset.pattern.permute.xlu0 0
    %402 = vperm.xlu0 %401, %v371
    %v403 = vpop.permute.xlu0 %402
    %v404 = vlaneseq
    %v405 = vshrl.u32 %v404, 7
    %v406 = vsub.s32 %v255, %v405
    %v407 = vrot.slane %v382, %v406
    %v408 = vlaneseq
    %v409 = vshrl.u32 %v408, 7
    %v410 = vsub.s32 %v255, %v409
    %v411 = vrot.slane %v385, %v410
    %v412 = vlaneseq
    %v413 = vshrl.u32 %v412, 7
    %v414 = vsub.s32 %v255, %v413
    %v415 = vrot.slane %v388, %v414
    %v416 = vlaneseq
    %v417 = vshrl.u32 %v416, 7
    %v418 = vsub.s32 %v255, %v417
    %v419 = vrot.slane %v391, %v418
    %v420 = vlaneseq
    %v421 = vshrl.u32 %v420, 7
    %v422 = vsub.s32 %v255, %v421
    %v423 = vrot.slane %v394, %v422
    %v424 = vlaneseq
    %v425 = vshrl.u32 %v424, 7
    %v426 = vsub.s32 %v255, %v425
    %v427 = vrot.slane %v397, %v426
    %v428 = vlaneseq
    %v429 = vshrl.u32 %v428, 7
    %v430 = vsub.s32 %v255, %v429
    %v431 = vrot.slane %v400, %v430
    %v432 = vlaneseq
    %v433 = vshrl.u32 %v432, 7
    %v434 = vsub.s32 %v255, %v433
    %v435 = vrot.slane %v403, %v434
    %v436 = vsel %vm288, %v411, %v407
    %v437 = vsel %vm290, %v415, %v436
    %v438 = vsel %vm292, %v419, %v437
    %v439 = vsel %vm294, %v423, %v438
    %v440 = vsel %vm296, %v427, %v439
    %v441 = vsel %vm298, %v431, %v440
    %v442 = vsel %vm300, %v435, %v441
    %v444 = vsel %vm303, %v442, 0.0
    %445 = vadd.xlane.f32.xlu0 %v444
    %v446 = vpop.xlane.xlu0 %445
    %v447 = vrcp.pop %v446
    %v449 = vlaneseq
    %v450 = vshrl.u32 %v449, 7
    %v451 = vsub.s32 0, %v450
    %v452 = vrot.slane %v447, %v451
    %v453 = vlaneseq
    %v454 = vshrl.u32 %v453, 7
    %v455 = vsub.s32 1, %v454
    %v456 = vrot.slane %v447, %v455
    %v457 = vlaneseq
    %v458 = vshrl.u32 %v457, 7
    %v459 = vsub.s32 2, %v458
    %v460 = vrot.slane %v447, %v459
    %v461 = vlaneseq
    %v462 = vshrl.u32 %v461, 7
    %v463 = vsub.s32 3, %v462
    %v464 = vrot.slane %v447, %v463
    %v465 = vlaneseq
    %v466 = vshrl.u32 %v465, 7
    %v467 = vsub.s32 4, %v466
    %v468 = vrot.slane %v447, %v467
    %v469 = vlaneseq
    %v470 = vshrl.u32 %v469, 7
    %v471 = vsub.s32 5, %v470
    %v472 = vrot.slane %v447, %v471
    %v473 = vlaneseq
    %v474 = vshrl.u32 %v473, 7
    %v475 = vsub.s32 6, %v474
    %v476 = vrot.slane %v447, %v475
    %v477 = vlaneseq
    %v478 = vshrl.u32 %v477, 7
    %v479 = vsub.s32 7, %v478
    %v480 = vrot.slane %v447, %v479
    %v489 = vmul.f32 %v357, %v452
    %v490 = vmul.f32 %v359, %v456
    %v491 = vmul.f32 %v361, %v460
    %v492 = vmul.f32 %v363, %v464
    %v493 = vmul.f32 %v365, %v468
    %v494 = vmul.f32 %v367, %v472
    %v495 = vmul.f32 %v369, %v476
    %v496 = vmul.f32 %v371, %v480
    %498 = vset.pattern.permute.xlu0 0
    %499 = vperm.xlu0 %498, %v489
    %v500 = vpop.permute.xlu0 %499
    %503 = vset.pattern.permute.xlu0 0
    %504 = vperm.xlu0 %503, %v490
    %v505 = vpop.permute.xlu0 %504
    %508 = vset.pattern.permute.xlu0 0
    %509 = vperm.xlu0 %508, %v491
    %v510 = vpop.permute.xlu0 %509
    %513 = vset.pattern.permute.xlu0 0
    %514 = vperm.xlu0 %513, %v492
    %v515 = vpop.permute.xlu0 %514
    %518 = vset.pattern.permute.xlu0 0
    %519 = vperm.xlu0 %518, %v493
    %v520 = vpop.permute.xlu0 %519
    %523 = vset.pattern.permute.xlu0 0
    %524 = vperm.xlu0 %523, %v494
    %v525 = vpop.permute.xlu0 %524
    %528 = vset.pattern.permute.xlu0 0
    %529 = vperm.xlu0 %528, %v495
    %v530 = vpop.permute.xlu0 %529
    %533 = vset.pattern.permute.xlu0 0
    %534 = vperm.xlu0 %533, %v496
    %v535 = vpop.permute.xlu0 %534
    %v537 = vmul.f32 %v39, %v500
    %v538 = vmul.f32 %v40, %v505
    %v539 = vmul.f32 %v41, %v510
    %v540 = vmul.f32 %v42, %v515
    %v541 = vmul.f32 %v43, %v520
    %v542 = vmul.f32 %v44, %v525
    %v543 = vmul.f32 %v45, %v530
    %v544 = vmul.f32 %v46, %v535
    %v545 = vsel %vm58, %v537, 0.0
    %v546 = vrot.slane %v545, 4
    %v547 = vadd.f32 %v545, %v546
    %v548 = vrot.slane %v547, 2
    %v549 = vadd.f32 %v547, %v548
    %v550 = vrot.slane %v549, 1
    %v551 = vadd.f32 %v549, %v550
    %v552 = vsel %vm58, %v538, 0.0
    %v553 = vrot.slane %v552, 4
    %v554 = vadd.f32 %v552, %v553
    %v555 = vrot.slane %v554, 2
    %v556 = vadd.f32 %v554, %v555
    %v557 = vrot.slane %v556, 1
    %v558 = vadd.f32 %v556, %v557
    %v559 = vsel %vm58, %v539, 0.0
    %v560 = vrot.slane %v559, 4
    %v561 = vadd.f32 %v559, %v560
    %v562 = vrot.slane %v561, 2
    %v563 = vadd.f32 %v561, %v562
    %v564 = vrot.slane %v563, 1
    %v565 = vadd.f32 %v563, %v564
    %v566 = vsel %vm58, %v540, 0.0
    %v567 = vrot.slane %v566, 4
    %v568 = vadd.f32 %v566, %v567
    %v569 = vrot.slane %v568, 2
    %v570 = vadd.f32 %v568, %v569
    %v571 = vrot.slane %v570, 1
    %v572 = vadd.f32 %v570, %v571
    %v573 = vsel %vm58, %v541, 0.0
    %v574 = vrot.slane %v573, 4
    %v575 = vadd.f32 %v573, %v574
    %v576 = vrot.slane %v575, 2
    %v577 = vadd.f32 %v575, %v576
    %v578 = vrot.slane %v577, 1
    %v579 = vadd.f32 %v577, %v578
    %v580 = vsel %vm58, %v542, 0.0
    %v581 = vrot.slane %v580, 4
    %v582 = vadd.f32 %v580, %v581
    %v583 = vrot.slane %v582, 2
    %v584 = vadd.f32 %v582, %v583
    %v585 = vrot.slane %v584, 1
    %v586 = vadd.f32 %v584, %v585
    %v587 = vsel %vm58, %v543, 0.0
    %v588 = vrot.slane %v587, 4
    %v589 = vadd.f32 %v587, %v588
    %v590 = vrot.slane %v589, 2
    %v591 = vadd.f32 %v589, %v590
    %v592 = vrot.slane %v591, 1
    %v593 = vadd.f32 %v591, %v592
    %v594 = vsel %vm58, %v544, 0.0
    %v595 = vrot.slane %v594, 4
    %v596 = vadd.f32 %v594, %v595
    %v597 = vrot.slane %v596, 2
    %v598 = vadd.f32 %v596, %v597
    %v599 = vrot.slane %v598, 1
    %v600 = vadd.f32 %v598, %v599
    %v609 = vsel %vm288, %v558, %v551
    %v610 = vsel %vm290, %v565, %v609
    %v611 = vsel %vm292, %v572, %v610
    %v612 = vsel %vm294, %v579, %v611
    %v613 = vsel %vm296, %v586, %v612
    %v614 = vsel %vm298, %v593, %v613
    %v615 = vsel %vm300, %v600, %v614
    %617 = vst.msk [vmem:[#allocation6] sm:$0xff] %vm58, %v615
    %v618 = vlaneseq
    %v619 = vshrl.u32 %v618, 7
    %v620 = vsub.s32 %v255, %v619
    %v621 = vrot.slane %v500, %v620
    %v622 = vlaneseq
    %v623 = vshrl.u32 %v622, 7
    %v624 = vsub.s32 %v255, %v623
    %v625 = vrot.slane %v505, %v624
    %v626 = vlaneseq
    %v627 = vshrl.u32 %v626, 7
    %v628 = vsub.s32 %v255, %v627
    %v629 = vrot.slane %v510, %v628
    %v630 = vlaneseq
    %v631 = vshrl.u32 %v630, 7
    %v632 = vsub.s32 %v255, %v631
    %v633 = vrot.slane %v515, %v632
    %v634 = vlaneseq
    %v635 = vshrl.u32 %v634, 7
    %v636 = vsub.s32 %v255, %v635
    %v637 = vrot.slane %v520, %v636
    %v638 = vlaneseq
    %v639 = vshrl.u32 %v638, 7
    %v640 = vsub.s32 %v255, %v639
    %v641 = vrot.slane %v525, %v640
    %v642 = vlaneseq
    %v643 = vshrl.u32 %v642, 7
    %v644 = vsub.s32 %v255, %v643
    %v645 = vrot.slane %v530, %v644
    %v646 = vlaneseq
    %v647 = vshrl.u32 %v646, 7
    %v648 = vsub.s32 %v255, %v647
    %v649 = vrot.slane %v535, %v648
    %v650 = vsel %vm288, %v625, %v621
    %v651 = vsel %vm290, %v629, %v650
    %v652 = vsel %vm292, %v633, %v651
    %v653 = vsel %vm294, %v637, %v652
    %v654 = vsel %vm296, %v641, %v653
    %v655 = vsel %vm298, %v645, %v654
    %v656 = vsel %vm300, %v649, %v655
    %658 = vst.msk [vmem:[#allocation7] sm:$0xff] %vm303, %v656
    // Predicated region
    $region26: #{tpu_custom_call.1} parent=1 // pred_check
      _
    $region27: #{tpu_custom_call.1} parent=1 // pred_check_branch
      %660 = sbr.rel (0) target = $region29
    $region28: #{tpu_custom_call.1} parent=1 // pred_region
      %s662 = ssub.s32 128, 128
      %663 = vsyncadd [#allocation5], %s662
      %s665 = sshll.u32 [#allocation6], 4
      %s666 = int_to_ptr.vmem [resolvable:$true] %s665
      %668 = dma.vmem_to_hbm [thread:$0]  %s666, 128, %s5, [#allocation5]
    $region29: #{tpu_custom_call.1} parent=1 // pred_fallthru
      _
    // Predicated region
    $region30: #{tpu_custom_call.1} parent=1 // pred_check
      _
    $region31: #{tpu_custom_call.1} parent=1 // pred_check_branch
      %670 = sbr.rel (0) target = $region33
    $region32: #{tpu_custom_call.1} parent=1 // pred_region
      %s672 = ssub.s32 128, 128
      %673 = vsyncadd [#allocation8], %s672
      %s675 = sshll.u32 [#allocation7], 4
      %s676 = int_to_ptr.vmem [resolvable:$true] %s675
      %678 = dma.vmem_to_hbm [thread:$0]  %s676, 128, %s6, [#allocation8]
    $region33: #{tpu_custom_call.1} parent=1 // pred_fallthru
      _
    // Predicated region
    $region34: #{tpu_custom_call.1} parent=1 // pred_check
      _
    $region35: #{tpu_custom_call.1} parent=1 // pred_check_branch
      %680 = sbr.rel (0) target = $region37
    $region36: #{tpu_custom_call.1} parent=1 // pred_region
      %681 = dma.done [#allocation5], 128
    $region37: #{tpu_custom_call.1} parent=1 // pred_fallthru
      _
    // Predicated region
    $region38: #{tpu_custom_call.1} parent=1 // pred_check
      _
    $region39: #{tpu_custom_call.1} parent=1 // pred_check_branch
      %683 = sbr.rel (0) target = $region41
    $region40: #{tpu_custom_call.1} parent=1 // pred_region
      %684 = dma.done [#allocation8], 128
    $region41: #{tpu_custom_call.1} parent=1 // pred_fallthru
      _
    %685 = vsyncpa [#allocation4], 1
    %686 = vsyncpa [#allocation5], 1
    %687 = vsyncpa [#allocation8], 1

</llo_original>
